<compile_context>
chip_gen: v6e
topology: v6e:2x2x1
jax: 0.10.0
libtpu: 0.0.40
codegen_flags: <defaults>
</compile_context>

<pallas_src>
import math
import functools

import jax
import jax.numpy as jnp
from jax.experimental import pallas as pl
from jax.experimental.pallas import tpu as pltpu


_TM_CAP = 512
_TN_CAP = 512
_TK_CAP = 2048


def _round_up(x, m):
    return ((x + m - 1) // m) * m


def _sublane_align(dtype):
    """Minimum sublane multiple for the packed layout of `dtype`."""
    itemsize = jnp.dtype(dtype).itemsize
    return {4: 8, 2: 16, 1: 32}.get(itemsize, 8)


def _vmem_budget_bytes():
    """Generation-aware scoped-VMEM budget (bytes) with headroom."""
    try:
        cap = int(pltpu.get_tpu_info().vmem_capacity_bytes)
    except Exception:
        cap = 64 * 1024 * 1024  # conservative fallback (v7x physical per-TC)
    # Leave ~25% headroom for Mosaic internals; never request more than 96 MiB.
    return int(min(cap * 3 // 4, 96 * 1024 * 1024))


def _choose_tile(dim, align, max_tile):
    """Pad `dim` to a multiple of `align`, then pick the largest tile <= max_tile
    such that the padded extent is an exact multiple of the tile with minimal
    extra padding. Returns (tile, padded_dim)."""
    dp0 = _round_up(max(int(dim), 1), align)
    steps = -(-dp0 // max_tile)                 # ceil-div
    tile = _round_up(-(-dp0 // steps), align)   # ceil-div then align
    return tile, tile * steps


# ---------------------------------------------------------------------------
# Kernels
# ---------------------------------------------------------------------------
def _matmul_bias_kernel(x_ref, w_ref, b_ref, o_ref, acc_ref):
    k = pl.program_id(2)

    @pl.when(k == 0)
    def _():
        # Fold the bias into the accumulator init: no add on the writeback path,
        # and the bias is applied exactly once per output tile.
        acc_ref[...] = jnp.broadcast_to(
            b_ref[...].astype(jnp.float32), acc_ref.shape)

    acc_ref[...] += jnp.dot(x_ref[...], w_ref[...],
                            preferred_element_type=jnp.float32)

    @pl.when(k == pl.num_programs(2) - 1)
    def _():
        o_ref[...] = acc_ref[...].astype(o_ref.dtype)


def _matmul_kernel(x_ref, w_ref, o_ref, acc_ref):
    k = pl.program_id(2)

    @pl.when(k == 0)
    def _():
        acc_ref[...] = jnp.zeros_like(acc_ref)

    acc_ref[...] += jnp.dot(x_ref[...], w_ref[...],
                            preferred_element_type=jnp.float32)

    @pl.when(k == pl.num_programs(2) - 1)
    def _():
        o_ref[...] = acc_ref[...].astype(o_ref.dtype)


# ---------------------------------------------------------------------------
# Forward (operates on pre-padded weight / bias)
# ---------------------------------------------------------------------------
@functools.partial(jax.jit,
                   static_argnames=("out_n", "tn", "tk", "vmem_limit"))
def _orthfc_apply(x, wp, bp, *, out_n, tn, tk, vmem_limit):
    """y = x @ W + b with W (and b) already padded to (Kp, Np) / (1, Np)."""
    M, K = x.shape
    Kp, Np = wp.shape

    m_align = _sublane_align(x.dtype)
    tm, Mp = _choose_tile(M, m_align, _TM_CAP)

    # Megacore (v7x): guarantee >= 2 blocks along a "parallel" axis when possible.
    if Mp // tm == 1 and Np // tn == 1:
        if Np % 256 == 0:
            tn = Np // 2
        elif Mp % (2 * m_align) == 0 and Mp >= 2 * m_align:
            tm = Mp // 2

    xp = x
    if (Mp, Kp) != (M, K):
        xp = jnp.pad(x, ((0, Mp - M), (0, Kp - K)))

    grid = (Mp // tm, Np // tn, Kp // tk)
    gi, gj, _ = grid

    x_spec = pl.BlockSpec((tm, tk), lambda i, j, k: (i, k))
    w_spec = pl.BlockSpec((tk, tn), lambda i, j, k: (k, j))
    o_spec = pl.BlockSpec((tm, tn), lambda i, j, k: (i, j))

    out_dtype = x.dtype
    out_shape = jax.ShapeDtypeStruct((Mp, Np), out_dtype)
    scratch = [pltpu.VMEM((tm, tn), jnp.float32)]

    # Truthful tiled-traffic estimate: x is re-read once per j block,
    # W once per i block.
    bytes_accessed = (Mp * Kp * jnp.dtype(x.dtype).itemsize * gj
                      + Kp * Np * jnp.dtype(wp.dtype).itemsize * gi
                      + Mp * Np * jnp.dtype(out_dtype).itemsize)
    if bp is not None:
        bytes_accessed += Np * jnp.dtype(bp.dtype).itemsize
    cost = pl.CostEstimate(flops=2 * Mp * Np * Kp, transcendentals=0,
                           bytes_accessed=int(bytes_accessed))

    cparams = pltpu.CompilerParams(
        dimension_semantics=("parallel", "parallel", "arbitrary"),
        vmem_limit_bytes=vmem_limit,
    )

    if bp is not None:
        b_spec = pl.BlockSpec((1, tn), lambda i, j, k: (0, j))
        yp = pl.pallas_call(
            _matmul_bias_kernel,
            out_shape=out_shape,
            grid_spec=pltpu.PrefetchScalarGridSpec(
                num_scalar_prefetch=0,
                grid=grid,
                in_specs=[x_spec, w_spec, b_spec],
                out_specs=o_spec,
                scratch_shapes=scratch,
            ),
            compiler_params=cparams,
            cost_estimate=cost,
        )(xp, wp, bp)
    else:
        yp = pl.pallas_call(
            _matmul_kernel,
            out_shape=out_shape,
            grid_spec=pltpu.PrefetchScalarGridSpec(
                num_scalar_prefetch=0,
                grid=grid,
                in_specs=[x_spec, w_spec],
                out_specs=o_spec,
                scratch_shapes=scratch,
            ),
            compiler_params=cparams,
            cost_estimate=cost,
        )(xp, wp)

    if (Mp, Np) != (M, out_n):
        yp = yp[:M, :out_n]
    return yp


# ---------------------------------------------------------------------------
# Layer wrapper: plans K/N tiling and pre-pads parameters once at construction
# ---------------------------------------------------------------------------
class OrthFC:
    """ORTHFC / newLinear forward: y = x @ W + b.

    Weight: (in_features, out_features). Padding of W / b to (8,128)-aligned,
    tile-divisible extents is done ONCE here, so the per-call forward never
    re-materializes the weight matrix in HBM.
    """

    def __init__(self, weight, bias=None):
        K, N = weight.shape
        self.K, self.N = int(K), int(N)
        self.vmem_limit = _vmem_budget_bytes()

        # Padding-aware K/N tile planning (independent of batch size); shrink
        # caps only if the worst-case (tm = cap) double-buffered working set
        # would exceed the VMEM budget.
        itemsize = jnp.dtype(weight.dtype).itemsize
        tk_cap, tn_cap = _TK_CAP, _TN_CAP
        while True:
            tn, Np = _choose_tile(self.N, 128, tn_cap)
            tk, Kp = _choose_tile(self.K, 128, tk_cap)
            working = (2 * (_TM_CAP * tk + tk * tn + tn) * itemsize  # dbl-buffered inputs
                       + 2 * _TM_CAP * tn * itemsize                 # dbl-buffered output
                       + _TM_CAP * tn * 4)                           # f32 accumulator
            if working <= self.vmem_limit or (tk_cap <= 256 and tn_cap <= 128):
                break
            if tk_cap > 256:
                tk_cap //= 2
            else:
                tn_cap //= 2
        self.tn, self.Np = tn, Np
        self.tk, self.Kp = tk, Kp

        wp = weight
        if (Kp, Np) != (self.K, self.N):
            wp = jnp.pad(weight, ((0, Kp - self.K), (0, Np - self.N)))
        self.wp = wp
        if bias is not None:
            bp = bias if Np == self.N else jnp.pad(bias, (0, Np - self.N))
            self.bp = bp.reshape(1, Np)
        else:
            self.bp = None

    def __call__(self, x):
        lead = x.shape[:-1]
        x2 = x.reshape(-1, x.shape[-1])
        y = _orthfc_apply(x2, self.wp, self.bp, out_n=self.N,
                          tn=self.tn, tk=self.tk, vmem_limit=self.vmem_limit)
        return y.reshape(*lead, self.N)


def orthfc_forward(x, weight, bias=None):
    """One-shot convenience wrapper (pads the weight per call; prefer OrthFC)."""
    return OrthFC(weight, bias)(x)


def init_params(key, in_features, out_features, bias=True, dtype=jnp.float32):
    """Init mirroring newLinear.reset_parameters().

    weight: (in_features, out_features), kaiming_uniform_(a=sqrt(5)) =>
            bound = 1/sqrt(fan_in) with PyTorch fan_in = weight.size(1) = out_features.
    bias:   uniform(-1/sqrt(fan_in), 1/sqrt(fan_in)) with the same fan_in.
    """
    # TODO(synk): geotorch.orthogonal parametrization (orthogonality constraint on W)
    # is a training-time re-parameterization, not a forward op; not re-implemented here.
    kw, kb = jax.random.split(key)
    fan_in = out_features
    bound = 1.0 / math.sqrt(fan_in)
    weight = jax.random.uniform(kw, (in_features, out_features), dtype=dtype,
                                minval=-bound, maxval=bound)
    if bias:
        b = jax.random.uniform(kb, (out_features,), dtype=dtype,
                               minval=-bound, maxval=bound)
    else:
        b = None
    return weight, b


if __name__ == "__main__":
    key = jax.random.PRNGKey(0)
    k_x1, k_p1, k_x2, k_p2 = jax.random.split(key, 4)

    # Test 1: tiny module-like shapes (single grid step, padded to (8,128)).
    batch, din, dout = 8, 32, 32
    x1 = jax.random.normal(k_x1, (batch, din), dtype=jnp.float32)
    w1, b1 = init_params(k_p1, din, dout, bias=True)
    layer1 = OrthFC(w1, b1)
    y1 = jax.block_until_ready(layer1(x1))
    assert y1.shape == (batch, dout)
    assert jnp.allclose(y1, x1 @ w1 + b1, atol=1e-5, rtol=1e-5)

    # Test 2: ragged K/N (K=640 -> tk=640 single K step, N=160 -> Np=256 with a
    # 2-block megacore split), bias folded into acc init, plus the no-bias path.
    batch2, din2, dout2 = 8, 640, 160
    x2 = jax.random.normal(k_x2, (batch2, din2), dtype=jnp.float32)
    w2, b2 = init_params(k_p2, din2, dout2, bias=True)
    layer2 = OrthFC(w2, b2)
    y2 = jax.block_until_ready(layer2(x2))
    assert jnp.allclose(y2, x2 @ w2 + b2, atol=1e-4, rtol=1e-4)
    layer2n = OrthFC(w2, None)
    y2n = jax.block_until_ready(layer2n(x2))
    assert jnp.allclose(y2n, x2 @ w2, atol=1e-4, rtol=1e-4)

    # Test 3: bf16 activation/weight path (16-aligned sublanes, f32 accumulator).
    x3 = x2.astype(jnp.bfloat16)
    w3 = w2.astype(jnp.bfloat16)
    b3 = b2.astype(jnp.bfloat16)
    layer3 = OrthFC(w3, b3)
    y3 = jax.block_until_ready(layer3(x3))
    ref3 = (x3.astype(jnp.float32) @ w3.astype(jnp.float32)
            + b3.astype(jnp.float32))
    assert jnp.allclose(y3.astype(jnp.float32), ref3, atol=0.5, rtol=0.05)

    print("KERNEL_OK")
</pallas_src>

<mosaic_0001>
module attributes {stable_mosaic.version = 11 : i64} {
  func.func @_matmul_bias_kernel(%arg0: i32, %arg1: i32, %arg2: i32, %arg3: memref<8x128xf32, #tpu.memory_space<vmem>>, %arg4: memref<128x128xf32, #tpu.memory_space<vmem>>, %arg5: memref<1x128xf32, #tpu.memory_space<vmem>>, %arg6: memref<8x128xf32, #tpu.memory_space<vmem>>, %arg7: memref<8x128xf32, #tpu.memory_space<vmem>>) attributes {dimension_semantics = [#tpu.dimension_semantics<parallel>, #tpu.dimension_semantics<parallel>, #tpu.dimension_semantics<arbitrary>], iteration_bounds = array<i64: 1, 1, 1>, scalar_prefetch = 0 : i64, scratch_operands = 1 : i64, tpu.core_type = #tpu.core_type<tc>, window_params = [{transform_indices = @transform_0, window_bounds = array<i64: 8, 128>}, {transform_indices = @transform_1, window_bounds = array<i64: 128, 128>}, {transform_indices = @transform_2, window_bounds = array<i64: 1, 128>}, {transform_indices = @transform_3, window_bounds = array<i64: 8, 128>}]} {
    %c0_i32 = arith.constant 0 : i32
    %0 = arith.cmpi eq, %arg2, %c0_i32 : i32
    %1 = arith.extui %0 : i1 to i32
    %c0_i32_0 = arith.constant 0 : i32
    %2 = arith.cmpi ne, %1, %c0_i32_0 : i32
    scf.if %2 {
      %c0_10 = arith.constant 0 : index
      %c0_11 = arith.constant 0 : index
      %12 = vector.load %arg5[%c0_10, %c0_11] : memref<1x128xf32, #tpu.memory_space<vmem>>, vector<1x128xf32>
      %13 = vector.shape_cast %12 : vector<1x128xf32> to vector<1x128xf32>
      %14 = vector.broadcast %13 : vector<1x128xf32> to vector<8x128xf32>
      %c0_12 = arith.constant 0 : index
      %c0_13 = arith.constant 0 : index
      %15 = vector.load %arg7[%c0_12, %c0_13] : memref<8x128xf32, #tpu.memory_space<vmem>>, vector<8x128xf32>
      tpu.vector_store %arg7[%c0_12, %c0_13], %14 {strides = array<i32>} : memref<8x128xf32, #tpu.memory_space<vmem>>, vector<8x128xf32>,
    } else {
    }
    %c0 = arith.constant 0 : index
    %c0_1 = arith.constant 0 : index
    %3 = vector.load %arg7[%c0, %c0_1] : memref<8x128xf32, #tpu.memory_space<vmem>>, vector<8x128xf32>
    %c0_2 = arith.constant 0 : index
    %c0_3 = arith.constant 0 : index
    %4 = vector.load %arg3[%c0_2, %c0_3] : memref<8x128xf32, #tpu.memory_space<vmem>>, vector<8x128xf32>
    %c0_4 = arith.constant 0 : index
    %c0_5 = arith.constant 0 : index
    %5 = vector.load %arg4[%c0_4, %c0_5] : memref<128x128xf32, #tpu.memory_space<vmem>>, vector<128x128xf32>
    %cst = arith.constant dense<0.000000e+00> : vector<8x128xf32>
    %6 = tpu.matmul %4, %5, %cst {dimension_numbers = #tpu.dot_dimension_numbers<[1], [0], [0], [1], [0, 0, 1, 1], [], []>} : vector<8x128xf32>, vector<128x128xf32>, vector<8x128xf32> -> vector<8x128xf32>
    %7 = arith.addf %3, %6 : vector<8x128xf32>
    %c0_6 = arith.constant 0 : index
    %c0_7 = arith.constant 0 : index
    %8 = vector.load %arg7[%c0_6, %c0_7] : memref<8x128xf32, #tpu.memory_space<vmem>>, vector<8x128xf32>
    tpu.vector_store %arg7[%c0_6, %c0_7], %7 {strides = array<i32>} : memref<8x128xf32, #tpu.memory_space<vmem>>, vector<8x128xf32>,
    %c0_i32_8 = arith.constant 0 : i32
    %9 = arith.cmpi eq, %arg2, %c0_i32_8 : i32
    %10 = arith.extui %9 : i1 to i32
    %c0_i32_9 = arith.constant 0 : i32
    %11 = arith.cmpi ne, %10, %c0_i32_9 : i32
    scf.if %11 {
      %c0_10 = arith.constant 0 : index
      %c0_11 = arith.constant 0 : index
      %12 = vector.load %arg7[%c0_10, %c0_11] : memref<8x128xf32, #tpu.memory_space<vmem>>, vector<8x128xf32>
      %c0_12 = arith.constant 0 : index
      %c0_13 = arith.constant 0 : index
      %13 = vector.load %arg6[%c0_12, %c0_13] : memref<8x128xf32, #tpu.memory_space<vmem>>, vector<8x128xf32>
      tpu.vector_store %arg6[%c0_12, %c0_13], %12 {strides = array<i32>} : memref<8x128xf32, #tpu.memory_space<vmem>>, vector<8x128xf32>,
    } else {
    }
    return
  }
  func.func @transform_0(%arg0: i32, %arg1: i32, %arg2: i32) -> (i32, i32) {
    %c0_i32 = arith.constant 0 : i32
    return %arg0, %arg2 : i32, i32
  }
  func.func @transform_1(%arg0: i32, %arg1: i32, %arg2: i32) -> (i32, i32) {
    %c0_i32 = arith.constant 0 : i32
    return %arg2, %arg1 : i32, i32
  }
  func.func @transform_2(%arg0: i32, %arg1: i32, %arg2: i32) -> (i32, i32) {
    %c0_i32 = arith.constant 0 : i32
    %c0_i32_0 = arith.constant 0 : i32
    return %c0_i32, %arg1 : i32, i32
  }
  func.func @transform_3(%arg0: i32, %arg1: i32, %arg2: i32) -> (i32, i32) {
    %c0_i32 = arith.constant 0 : i32
    return %arg0, %arg1 : i32, i32
  }
}

</mosaic_0001>

<llo_original>
// kernel: _orthfc_apply.1
$region0: #{_orthfc_apply.1}
  #allocation0 [shape = 'u32[]', space=smem, size = 0x4, offset = 0x4, fixed_abs, tag = 'smem constant byte address 0x4 - core index']
  #allocation1 [shape = 'u32[144,128]{1,0:T(1,128)}', space=vmem, size = 0x12000, scoped, tag = 'internal scratch']
  #allocation2 [shape = 'f32[8,128]{1,0:T(8,128)}', space=vmem, size = 0x1000, scoped, tag = 'scratch operand']
  %s0 = inlined_call_operand.vmem [shape: f32[8,128], index: 0, kind: input, shape index: {}]
  %s1 = inlined_call_operand.hbm [shape: f32[128,128], index: 1, kind: input, shape index: {}]
  %s2 = inlined_call_operand.vmem [shape: f32[1,128], index: 2, kind: input, shape index: {}]
  %s3 = inlined_call_operand.hbm [shape: f32[8,128], index: 3, kind: output, shape index: {}]
  %s4 = sld [smem:[#allocation0]]
  $region34: #{_orthfc_apply.1} parent=0
    _
  %s6 = ssub.s32 1, %s4
  %s7 = scalar_select 0, %s6, %s4
  $region1: #{_orthfc_apply.1} parent=0
    #allocation3 [shape = 'u8[65536]{0}', space=vmem, size = 0x10000, scoped, tag = 'input window, operand 1, single buffered']
    #allocation4 [shape = 's32[1]{0}', space=sflag, size = 0x4, scoped, tag = 'scoped memory for _orthfc_apply.1']
    #allocation5 [shape = 's32[1]{0}', space=sflag, size = 0x4, scoped, tag = 'scoped memory for _orthfc_apply.1']
    #allocation6 [shape = 'u8[4096]{0}', space=vmem, size = 0x1000, scoped, tag = 'output window, operand 0, single buffered']
    %8 = vsyncpa [#allocation4], 0
    %9 = vsyncpa [#allocation5], 0
    // Predicated region
    $region2: #{_orthfc_apply.1} parent=1 // pred_check
      _
    $region3: #{_orthfc_apply.1} parent=1 // pred_check_branch
      %11 = sbr.rel (0) target = $region5
    $region4: #{_orthfc_apply.1} parent=1 // pred_region
      _
    $region5: #{_orthfc_apply.1} parent=1 // pred_fallthru
      _
    // Predicated region
    $region6: #{_orthfc_apply.1} parent=1 // pred_check
      _
    $region7: #{_orthfc_apply.1} parent=1 // pred_check_branch
      %13 = sbr.rel (0) target = $region9
    $region8: #{_orthfc_apply.1} parent=1 // pred_region
      %s15 = ssub.s32 2048, 2048
      %16 = vsyncadd [#allocation4], %s15
      %s17 = sshll.u32 [#allocation3], 4
      %s18 = int_to_ptr.vmem [resolvable:$true] %s17
      %23 = dma.hbm_to_vmem [thread:$0]  %s1, 2048, %s18, [#allocation4], 128, 128, 8
    $region9: #{_orthfc_apply.1} parent=1 // pred_fallthru
      _
    // Predicated region
    $region10: #{_orthfc_apply.1} parent=1 // pred_check
      _
    $region11: #{_orthfc_apply.1} parent=1 // pred_check_branch
      %25 = sbr.rel (0) target = $region13
    $region12: #{_orthfc_apply.1} parent=1 // pred_region
      _
    $region13: #{_orthfc_apply.1} parent=1 // pred_fallthru
      _
    // Predicated region
    $region14: #{_orthfc_apply.1} parent=1 // pred_check
      _
    $region15: #{_orthfc_apply.1} parent=1 // pred_check_branch
      %27 = sbr.rel (0) target = $region17
    $region16: #{_orthfc_apply.1} parent=1 // pred_region
      %28 = dma.done [#allocation4], 2048
    $region17: #{_orthfc_apply.1} parent=1 // pred_fallthru
      _
    %p29 = scmp.eq.s32.totalorder 0, 0
    // Predicated region
    $region18: #{_orthfc_apply.1} parent=1 // pred_check
      %p30 = pneg %p29
    $region19: #{_orthfc_apply.1} parent=1 // pred_check_branch
      %32 = sbr.rel (%p30) target = $region21
    $region20: #{_orthfc_apply.1} parent=1 // pred_region
      %v33 = vld [vmem:[%s2] sm:$0x1]
      %v35 = vlaneseq
      %v36 = vshrl.u32 %v35, 7
      %v37 = vsub.s32 0, %v36
      %v38 = vrot.slane %v33, %v37
      %40 = vst [vmem:[#allocation2] sm:$0xff] %v38
    $region21: #{_orthfc_apply.1} parent=1 // pred_fallthru
      _
    %v41 = vld [vmem:[#allocation2] sm:$0xff]
    %v42 = vld [vmem:[%s0] sm:$0xff]
    %v43 = vld [vmem:[#allocation3] sm:$0xff]
    %v44 = vld [vmem:[#allocation3 + $0x8] sm:$0xff]
    %v45 = vld [vmem:[#allocation3 + $0x10] sm:$0xff]
    %v46 = vld [vmem:[#allocation3 + $0x18] sm:$0xff]
    %v47 = vld [vmem:[#allocation3 + $0x20] sm:$0xff]
    %v48 = vld [vmem:[#allocation3 + $0x28] sm:$0xff]
    %v49 = vld [vmem:[#allocation3 + $0x30] sm:$0xff]
    %v50 = vld [vmem:[#allocation3 + $0x38] sm:$0xff]
    %v51 = vld [vmem:[#allocation3 + $0x40] sm:$0xff]
    %v52 = vld [vmem:[#allocation3 + $0x48] sm:$0xff]
    %v53 = vld [vmem:[#allocation3 + $0x50] sm:$0xff]
    %v54 = vld [vmem:[#allocation3 + $0x58] sm:$0xff]
    %v55 = vld [vmem:[#allocation3 + $0x60] sm:$0xff]
    %v56 = vld [vmem:[#allocation3 + $0x68] sm:$0xff]
    %v57 = vld [vmem:[#allocation3 + $0x70] sm:$0xff]
    %v58 = vld [vmem:[#allocation3 + $0x78] sm:$0xff]
    %59 = vmatprep.subr.mxu0 0.0
    %60 = vmatpush1.msra.mxu0 %v58
    %61 = vmatprep.subr.mxu0 0.0
    %62 = vmatpush1.msra.mxu0 %v57
    %63 = vmatprep.subr.mxu0 0.0
    %64 = vmatpush1.msra.mxu0 %v56
    %65 = vmatprep.subr.mxu0 0.0
    %66 = vmatpush1.msra.mxu0 %v55
    %67 = vmatprep.subr.mxu0 0.0
    %68 = vmatpush1.msra.mxu0 %v54
    %69 = vmatprep.subr.mxu0 0.0
    %70 = vmatpush1.msra.mxu0 %v53
    %71 = vmatprep.subr.mxu0 0.0
    %72 = vmatpush1.msra.mxu0 %v52
    %73 = vmatprep.subr.mxu0 0.0
    %74 = vmatpush1.msra.mxu0 %v51
    %75 = vmatprep.subr.mxu0 0.0
    %76 = vmatpush1.msra.mxu0 %v50
    %77 = vmatprep.subr.mxu0 0.0
    %78 = vmatpush1.msra.mxu0 %v49
    %79 = vmatprep.subr.mxu0 0.0
    %80 = vmatpush1.msra.mxu0 %v48
    %81 = vmatprep.subr.mxu0 0.0
    %82 = vmatpush1.msra.mxu0 %v47
    %83 = vmatprep.subr.mxu0 0.0
    %84 = vmatpush1.msra.mxu0 %v46
    %85 = vmatprep.subr.mxu0 0.0
    %86 = vmatpush1.msra.mxu0 %v45
    %87 = vmatprep.subr.mxu0 0.0
    %88 = vmatpush1.msra.mxu0 %v44
    %89 = vmatprep.subr.mxu0 0.0
    %90 = vmatpush1.msra.mxu0 %v43
    %91 = vmatprep.subr.mxu0 0.0
    %92 = vmatpush2.msra.mxu0 0.0
    %93 = vmatprep.subr.mxu0 0.0
    %94 = vmatpush2.msra.mxu0 0.0
    %95 = vmatprep.subr.mxu0 0.0
    %96 = vmatpush2.msra.mxu0 0.0
    %97 = vmatprep.subr.mxu0 0.0
    %98 = vmatpush2.msra.mxu0 0.0
    %99 = vmatprep.subr.mxu0 0.0
    %100 = vmatpush2.msra.mxu0 0.0
    %101 = vmatprep.subr.mxu0 0.0
    %102 = vmatpush2.msra.mxu0 0.0
    %103 = vmatprep.subr.mxu0 0.0
    %104 = vmatpush2.msra.mxu0 0.0
    %105 = vmatprep.subr.mxu0 0.0
    %106 = vmatpush2.msra.mxu0 0.0
    %107 = vmatprep.subr.mxu0 0.0
    %108 = vmatpush2.msra.mxu0 0.0
    %109 = vmatprep.subr.mxu0 0.0
    %110 = vmatpush2.msra.mxu0 0.0
    %111 = vmatprep.subr.mxu0 0.0
    %112 = vmatpush2.msra.mxu0 0.0
    %113 = vmatprep.subr.mxu0 0.0
    %114 = vmatpush2.msra.mxu0 0.0
    %115 = vmatprep.subr.mxu0 0.0
    %116 = vmatpush2.msra.mxu0 0.0
    %117 = vmatprep.subr.mxu0 0.0
    %118 = vmatpush2.msra.mxu0 0.0
    %119 = vmatprep.subr.mxu0 0.0
    %120 = vmatpush2.msra.mxu0 0.0
    %121 = vmatprep.subr.mxu0 0.0
    %122 = vmatpush2.msra.mxu0 0.0
    %123 = vmatprep.mubr.f32.mxu0 0.0
    %124 = vmatmul.mubr.f32.gmra.mxu0 %v42
    %v125 = vpop.f32.mrf.mxu0
    %v126 = vadd.f32 0.0, %v125
    %v127 = vpop.f32.mrf.mxu0
    %128 = vdwg.mxu0
    %v129 = vadd.f32 %v41, %v126
    %130 = vst [vmem:[#allocation2] sm:$0xff] %v129
    // Predicated region
    $region22: #{_orthfc_apply.1} parent=1 // pred_check
      %p131 = pneg %p29
    $region23: #{_orthfc_apply.1} parent=1 // pred_check_branch
      %133 = sbr.rel (%p131) target = $region25
    $region24: #{_orthfc_apply.1} parent=1 // pred_region
      %v134 = vld [vmem:[#allocation2] sm:$0xff]
      %135 = vst [vmem:[#allocation6] sm:$0xff] %v134
    $region25: #{_orthfc_apply.1} parent=1 // pred_fallthru
      _
    // Predicated region
    $region26: #{_orthfc_apply.1} parent=1 // pred_check
      _
    $region27: #{_orthfc_apply.1} parent=1 // pred_check_branch
      %137 = sbr.rel (0) target = $region29
    $region28: #{_orthfc_apply.1} parent=1 // pred_region
      %s139 = ssub.s32 128, 128
      %140 = vsyncadd [#allocation5], %s139
      %s142 = sshll.u32 [#allocation6], 4
      %s143 = int_to_ptr.vmem [resolvable:$true] %s142
      %145 = dma.vmem_to_hbm [thread:$0]  %s143, 128, %s3, [#allocation5]
    $region29: #{_orthfc_apply.1} parent=1 // pred_fallthru
      _
    // Predicated region
    $region30: #{_orthfc_apply.1} parent=1 // pred_check
      _
    $region31: #{_orthfc_apply.1} parent=1 // pred_check_branch
      %147 = sbr.rel (0) target = $region33
    $region32: #{_orthfc_apply.1} parent=1 // pred_region
      %148 = dma.done [#allocation5], 128
    $region33: #{_orthfc_apply.1} parent=1 // pred_fallthru
      _
    %149 = vsyncpa [#allocation4], 1
    %150 = vsyncpa [#allocation5], 1

</llo_original>
